<compile_context>
chip_gen: v7x
topology: tpu7x:2x2x1
jax: 0.10.0
libtpu: 0.0.40
codegen_flags: <defaults>
</compile_context>

<pallas_src>
import functools

import jax
import jax.numpy as jnp
import numpy as np
from jax import lax
from jax.experimental import pallas as pl
from jax.experimental.pallas import tpu as pltpu

PAD = 128  # lane-dense packed output width (probs | value | zero padding)


# ----------------------------- Pallas kernel --------------------------------
def actor_critic_kernel(n_actions,
                        s_ref,                       # (TB, n_states)
                        w1_ref,                      # (n_states, 256)
                        wf2_ref,                     # (256, 256)  [ac1 | h2pre]
                        wf3_ref,                     # (128, 192)  [ac2 | h3pre]
                        wf4_ref,                     # (64, 160)   [ac3 | h4pre]
                        wp4_ref,                     # (32, 128)   ac4
                        w2d_ref,                     # (128, 128)  block-diag head
                        bias_ref,                    # (8, 256) f32 bias slab
                        out_ref):                    # (TB, 128)
    relu = lambda v: jnp.maximum(v, 0.0)
    # Cast activations to the (possibly bf16) weight dtype right before the dot;
    # accumulation and all element-wise math stay f32.
    mm = lambda a, b: jnp.dot(a.astype(b.dtype), b,
                              preferred_element_type=jnp.float32)

    bias = bias_ref[...]                              # (8, 256) f32
    x = s_ref[...]                                    # (TB, n_states)

    # --- PSCN layer 1 -------------------------------------------------------
    h1 = relu(mm(x, w1_ref[...]) + bias[0:1, :])      # (TB, 256)

    # --- fused step 2: lanes [0:128] = out1@wac[:128] + bh, [128:256] = h2pre ---
    y2 = mm(h1, wf2_ref[...]) + bias[1:2, :]          # (TB, 256)
    acc = y2[:, :128]                                 # feat-layer accumulation
    h2 = relu(y2[:, 128:])                            # (TB, 128)

    # --- fused step 3: lanes [0:128] = out2@wac[128:192], [128:192] = h3pre ---
    y3 = mm(h2, wf3_ref[...]) + bias[2:3, :192]       # (TB, 192)
    acc = acc + y3[:, :128]
    h3 = relu(y3[:, 128:])                            # (TB, 64)

    # --- fused step 4: lanes [0:128] = out3@wac[192:224], [128:160] = h4pre ---
    y4 = mm(h3, wf4_ref[...]) + bias[3:4, :160]       # (TB, 160)
    acc = acc + y4[:, :128]
    h4 = relu(y4[:, 128:])                            # (TB, 32)

    # --- last feature contribution + fused actor|critic first layer ---------
    acc = acc + mm(h4, wp4_ref[...])                  # = feat @ [wa1|wc1] + [ba1|bc1]
    ac = relu(acc)                                    # (TB, 128) [actor_h | critic_h]

    # --- fused block-diagonal second layer -----------------------------------
    # lanes [0..na-1] = actor logits, lane na = critic value, rest = 0
    comb = mm(ac, w2d_ref[...]) + bias[4:5, :128]     # (TB, 128)

    lane = lax.broadcasted_iota(jnp.int32, comb.shape, dimension=1)
    is_logit = lane < n_actions
    masked = jnp.where(is_logit, comb, -jnp.inf)
    m = jnp.max(masked, axis=-1, keepdims=True)
    e = jnp.exp(masked - m)                           # padded lanes -> exp(-inf) = 0
    denom = jnp.sum(e, axis=-1, keepdims=True)
    prob = e * pl.reciprocal(denom, approx=True)      # EUP slot, ~free

    # single unmasked, 128-lane-dense store: probs in [0..na-1], value in lane na
    out_ref[...] = jnp.where(lane == n_actions, comb, prob)


# ------------------------------- wrapper -------------------------------------
def actor_critic_forward(s, packed, n_actions, *, batch_tile=1024):
    B, n_states = s.shape

    # Batch tiling: single tile for small batches; for larger batches guarantee
    # >= 2 grid steps so the "parallel" axis shards across v7x's two TensorCores.
    if B <= 256:
        tb = B
    else:
        half = -(-B // 2)                      # cdiv(B, 2)
        tb = min(batch_tile, ((half + 7) // 8) * 8)
    grid = (pl.cdiv(B, tb),)

    names = ["w1", "wf2", "wf3", "wf4", "wp4", "w2d", "bias"]
    weights = [packed[k] for k in names]

    # VMEM guard: double-buffered in/out tiles + resident weights must stay well
    # under the smallest scoped-VMEM default (16 MiB on v5e; v7x physical = 64 MiB).
    weight_bytes = sum(int(w.size) * w.dtype.itemsize for w in weights)
    act_bytes = 2 * tb * (n_states + PAD) * 4
    assert 2 * weight_bytes + act_bytes < 12 * 2 ** 20, \
        "batch_tile too large for scoped-VMEM defaults; lower it or set vmem_limit_bytes"

    in_specs = [pl.BlockSpec((tb, n_states), lambda i: (i, 0))]              # batch tile
    in_specs += [pl.BlockSpec(w.shape, lambda i: (0, 0)) for w in weights]   # resident
    out_spec = pl.BlockSpec((tb, PAD), lambda i: (i, 0))                     # lane-dense

    out = pl.pallas_call(
        functools.partial(actor_critic_kernel, n_actions),
        grid=grid,
        in_specs=in_specs,
        out_specs=out_spec,
        out_shape=jax.ShapeDtypeStruct((B, PAD), jnp.float32),
        compiler_params=pltpu.CompilerParams(
            dimension_semantics=("parallel",)),
    )(s, *weights)

    prob = out[:, :n_actions]
    value = out[:, n_actions:n_actions + 1]
    return prob, value


# --------------------------- parameter init -----------------------------------
def init_params(key, n_states, n_actions):
    """Deterministic PyTorch-Linear-style init (uniform +-1/sqrt(fan_in))."""
    def linear_init(k, fan_in, fan_out):
        k_w, k_b = jax.random.split(k)
        bound = 1.0 / np.sqrt(fan_in)
        w = jax.random.uniform(k_w, (fan_in, fan_out), jnp.float32, -bound, bound)
        b = jax.random.uniform(k_b, (1, fan_out), jnp.float32, -bound, bound)
        return w, b

    keys = jax.random.split(key, 8)
    p = {}
    p["w1"], p["b1"] = linear_init(keys[0], n_states, 256)
    p["w2"], p["b2"] = linear_init(keys[1], 128, 128)
    p["w3"], p["b3"] = linear_init(keys[2], 64, 64)
    p["w4"], p["b4"] = linear_init(keys[3], 32, 32)
    p["wa1"], p["ba1"] = linear_init(keys[4], 256, 64)
    p["wa2"], p["ba2"] = linear_init(keys[5], 64, n_actions)
    p["wc1"], p["bc1"] = linear_init(keys[6], 256, 64)
    p["wc2"], p["bc2"] = linear_init(keys[7], 64, 1)
    return p


# ------------------------- host-side weight packing ---------------------------
def pack_params(p, n_actions, weight_dtype=jnp.bfloat16):
    """Repack nn.Linear-shaped params into fused kernel weights.

    weight_dtype: jnp.bfloat16 (default, perf config) or jnp.float32 (exact
    parity with the f32 PyTorch module).  Biases always stay f32.
    """
    f32 = jnp.float32
    wac = jnp.concatenate([p["wa1"], p["wc1"]], axis=1)        # (256, 128)
    bh = jnp.concatenate([p["ba1"], p["bc1"]], axis=1)         # (1, 128)

    # fused step 2: h1 @ [wac[:128] (from h1[:,:128]) | w2 (from h1[:,128:])]
    wf2 = jnp.zeros((256, 256), f32)
    wf2 = wf2.at[0:128, 0:128].set(wac[0:128])
    wf2 = wf2.at[128:256, 128:256].set(p["w2"])

    # fused step 3: h2 @ [wac[128:192] (from h2[:,:64]) | w3 (from h2[:,64:])]
    wf3 = jnp.zeros((128, 192), f32)
    wf3 = wf3.at[0:64, 0:128].set(wac[128:192])
    wf3 = wf3.at[64:128, 128:192].set(p["w3"])

    # fused step 4: h3 @ [wac[192:224] (from h3[:,:32]) | w4 (from h3[:,32:])]
    wf4 = jnp.zeros((64, 160), f32)
    wf4 = wf4.at[0:32, 0:128].set(wac[192:224])
    wf4 = wf4.at[32:64, 128:160].set(p["w4"])

    wp4 = wac[224:256]                                          # (32, 128)

    # block-diagonal second layer: actor hidden -> logits, critic hidden -> value
    w2d = jnp.zeros((128, 128), f32)
    w2d = w2d.at[:64, :n_actions].set(p["wa2"])
    w2d = w2d.at[64:, n_actions:n_actions + 1].set(p["wc2"])

    # single bias slab (8, 256) f32
    bias = jnp.zeros((8, 256), f32)
    bias = bias.at[0:1, :].set(p["b1"])
    bias = bias.at[1:2, 0:128].set(bh)
    bias = bias.at[1:2, 128:256].set(p["b2"])
    bias = bias.at[2:3, 128:192].set(p["b3"])
    bias = bias.at[3:4, 128:160].set(p["b4"])
    bias = bias.at[4:5, 0:n_actions].set(p["ba2"])
    bias = bias.at[4:5, n_actions:n_actions + 1].set(p["bc2"])

    wd = weight_dtype
    return {
        "w1": p["w1"].astype(wd),
        "wf2": wf2.astype(wd),
        "wf3": wf3.astype(wd),
        "wf4": wf4.astype(wd),
        "wp4": wp4.astype(wd),
        "w2d": w2d.astype(wd),
        "bias": bias,                 # keep f32
    }


# --------------------------- pure-JAX reference -------------------------------
def reference_forward(s, p):
    relu = lambda v: jnp.maximum(v, 0.0)
    hp = lax.Precision.HIGHEST       # true-f32 matmuls for a stable ground truth
    lin = lambda v, w, b: jnp.dot(v, w, precision=hp) + b
    h = relu(lin(s, p["w1"], p["b1"]))
    out1, h = h[:, :128], h[:, 128:]
    h = relu(lin(h, p["w2"], p["b2"]))
    out2, h = h[:, :64], h[:, 64:]
    h = relu(lin(h, p["w3"], p["b3"]))
    out3, h = h[:, :32], h[:, 32:]
    out4 = relu(lin(h, p["w4"], p["b4"]))
    feat = jnp.concatenate([out1, out2, out3, out4], axis=-1)
    logits = lin(relu(lin(feat, p["wa1"], p["ba1"])), p["wa2"], p["ba2"])
    prob = jax.nn.softmax(logits, axis=-1)
    value = lin(relu(lin(feat, p["wc1"], p["bc1"])), p["wc2"], p["bc2"])
    return prob, value


if __name__ == "__main__":
    n_states, n_actions = 8, 4        # LunarLander-v2: 8 states, 4 actions
    key = jax.random.PRNGKey(0)
    k_param, k_in1, k_in2 = jax.random.split(key, 3)
    params = init_params(k_param, n_states, n_actions)

    # --- run 1: f32 weights, tiny batch (single tile, parity config) ----------
    batch = 8
    s = jax.random.normal(k_in1, (batch, n_states), dtype=jnp.float32)
    packed_f32 = pack_params(params, n_actions, weight_dtype=jnp.float32)
    prob, value = actor_critic_forward(s, packed_f32, n_actions)
    jax.block_until_ready((prob, value))

    prob_ref, value_ref = reference_forward(s, params)
    # 5e-3: covers TPU default (bf16-pass) matmul precision inside the kernel.
    np.testing.assert_allclose(np.asarray(prob), np.asarray(prob_ref),
                               rtol=5e-3, atol=5e-3)
    np.testing.assert_allclose(np.asarray(value), np.asarray(value_ref),
                               rtol=5e-3, atol=5e-3)
    # approx EUP reciprocal -> probs sum to 1 only approximately
    np.testing.assert_allclose(np.asarray(prob).sum(-1), np.ones(batch),
                               rtol=5e-3, atol=5e-3)
    assert prob.shape == (batch, n_actions) and value.shape == (batch, 1)

    # --- run 2: bf16 weights (perf config), multi-tile batch (grid=2, v7x path) ---
    batch2 = 320
    s2 = jax.random.normal(k_in2, (batch2, n_states), dtype=jnp.float32)
    packed_bf16 = pack_params(params, n_actions, weight_dtype=jnp.bfloat16)
    prob2, value2 = actor_critic_forward(s2, packed_bf16, n_actions)
    jax.block_until_ready((prob2, value2))

    prob2_ref, value2_ref = reference_forward(s2, params)
    # tolerance sized for bf16 (2^-8) operand rounding across 6 matmuls
    np.testing.assert_allclose(np.asarray(prob2), np.asarray(prob2_ref),
                               rtol=2e-2, atol=2e-2)
    np.testing.assert_allclose(np.asarray(value2), np.asarray(value2_ref),
                               rtol=2e-2, atol=2e-2)
    np.testing.assert_allclose(np.asarray(prob2).sum(-1), np.ones(batch2),
                               rtol=5e-3, atol=5e-3)
    assert prob2.shape == (batch2, n_actions) and value2.shape == (batch2, 1)

    print("KERNEL_OK")
</pallas_src>

<mosaic_0001>
module attributes {stable_mosaic.version = 11 : i64} {
  func.func @actor_critic_kernel(%arg0: i32, %arg1: memref<8x8xf32, #tpu.memory_space<vmem>>, %arg2: memref<8x256xf32, #tpu.memory_space<vmem>>, %arg3: memref<256x256xf32, #tpu.memory_space<vmem>>, %arg4: memref<128x192xf32, #tpu.memory_space<vmem>>, %arg5: memref<64x160xf32, #tpu.memory_space<vmem>>, %arg6: memref<32x128xf32, #tpu.memory_space<vmem>>, %arg7: memref<128x128xf32, #tpu.memory_space<vmem>>, %arg8: memref<8x256xf32, #tpu.memory_space<vmem>>, %arg9: memref<8x128xf32, #tpu.memory_space<vmem>>) attributes {dimension_semantics = [#tpu.dimension_semantics<parallel>], iteration_bounds = array<i64: 1>, scalar_prefetch = 0 : i64, scratch_operands = 0 : i64, tpu.core_type = #tpu.core_type<tc>, window_params = [{transform_indices = @transform_0, window_bounds = array<i64: 8, 8>}, {pipeline_mode = #tpu.pipeline_mode<synchronous>, transform_indices = @transform_1, window_bounds = array<i64: 8, 256>}, {pipeline_mode = #tpu.pipeline_mode<synchronous>, transform_indices = @transform_2, window_bounds = array<i64: 256, 256>}, {pipeline_mode = #tpu.pipeline_mode<synchronous>, transform_indices = @transform_3, window_bounds = array<i64: 128, 192>}, {pipeline_mode = #tpu.pipeline_mode<synchronous>, transform_indices = @transform_4, window_bounds = array<i64: 64, 160>}, {pipeline_mode = #tpu.pipeline_mode<synchronous>, transform_indices = @transform_5, window_bounds = array<i64: 32, 128>}, {pipeline_mode = #tpu.pipeline_mode<synchronous>, transform_indices = @transform_6, window_bounds = array<i64: 128, 128>}, {pipeline_mode = #tpu.pipeline_mode<synchronous>, transform_indices = @transform_7, window_bounds = array<i64: 8, 256>}, {transform_indices = @transform_8, window_bounds = array<i64: 8, 128>}]} {
    %c0 = arith.constant 0 : index
    %c0_0 = arith.constant 0 : index
    %0 = vector.load %arg8[%c0, %c0_0] : memref<8x256xf32, #tpu.memory_space<vmem>>, vector<8x256xf32>
    %c0_1 = arith.constant 0 : index
    %c0_2 = arith.constant 0 : index
    %1 = vector.load %arg1[%c0_1, %c0_2] : memref<8x8xf32, #tpu.memory_space<vmem>>, vector<8x8xf32>
    %c0_3 = arith.constant 0 : index
    %c0_4 = arith.constant 0 : index
    %2 = vector.load %arg2[%c0_3, %c0_4] : memref<8x256xf32, #tpu.memory_space<vmem>>, vector<8x256xf32>
    %cst = arith.constant dense<0.000000e+00> : vector<8x256xf32>
    %3 = tpu.matmul %1, %2, %cst {dimension_numbers = #tpu.dot_dimension_numbers<[1], [0], [0], [1], [0, 0, 1, 1], [], []>} : vector<8x8xf32>, vector<8x256xf32>, vector<8x256xf32> -> vector<8x256xf32>
    %4 = vector.extract_strided_slice %0 {offsets = [0, 0], sizes = [1, 256], strides = [1, 1]} : vector<8x256xf32> to vector<1x256xf32>
    %5 = vector.broadcast %4 : vector<1x256xf32> to vector<8x256xf32>
    %6 = arith.addf %3, %5 : vector<8x256xf32>
    %cst_5 = arith.constant 0.000000e+00 : f32
    %7 = vector.broadcast %cst_5 : f32 to vector<8x256xf32>
    %8 = arith.maximumf %6, %7 : vector<8x256xf32>
    %c0_6 = arith.constant 0 : index
    %c0_7 = arith.constant 0 : index
    %9 = vector.load %arg3[%c0_6, %c0_7] : memref<256x256xf32, #tpu.memory_space<vmem>>, vector<256x256xf32>
    %cst_8 = arith.constant dense<0.000000e+00> : vector<8x256xf32>
    %10 = tpu.matmul %8, %9, %cst_8 {dimension_numbers = #tpu.dot_dimension_numbers<[1], [0], [0], [1], [0, 0, 1, 1], [], []>} : vector<8x256xf32>, vector<256x256xf32>, vector<8x256xf32> -> vector<8x256xf32>
    %11 = vector.extract_strided_slice %0 {offsets = [1, 0], sizes = [1, 256], strides = [1, 1]} : vector<8x256xf32> to vector<1x256xf32>
    %12 = vector.broadcast %11 : vector<1x256xf32> to vector<8x256xf32>
    %13 = arith.addf %10, %12 : vector<8x256xf32>
    %14 = vector.extract_strided_slice %13 {offsets = [0, 0], sizes = [8, 128], strides = [1, 1]} : vector<8x256xf32> to vector<8x128xf32>
    %15 = vector.extract_strided_slice %13 {offsets = [0, 128], sizes = [8, 128], strides = [1, 1]} : vector<8x256xf32> to vector<8x128xf32>
    %cst_9 = arith.constant 0.000000e+00 : f32
    %16 = vector.broadcast %cst_9 : f32 to vector<8x128xf32>
    %17 = arith.maximumf %15, %16 : vector<8x128xf32>
    %c0_10 = arith.constant 0 : index
    %c0_11 = arith.constant 0 : index
    %18 = vector.load %arg4[%c0_10, %c0_11] : memref<128x192xf32, #tpu.memory_space<vmem>>, vector<128x192xf32>
    %cst_12 = arith.constant dense<0.000000e+00> : vector<8x192xf32>
    %19 = tpu.matmul %17, %18, %cst_12 {dimension_numbers = #tpu.dot_dimension_numbers<[1], [0], [0], [1], [0, 0, 1, 1], [], []>} : vector<8x128xf32>, vector<128x192xf32>, vector<8x192xf32> -> vector<8x192xf32>
    %20 = vector.extract_strided_slice %0 {offsets = [2, 0], sizes = [1, 192], strides = [1, 1]} : vector<8x256xf32> to vector<1x192xf32>
    %21 = vector.broadcast %20 : vector<1x192xf32> to vector<8x192xf32>
    %22 = arith.addf %19, %21 : vector<8x192xf32>
    %23 = vector.extract_strided_slice %22 {offsets = [0, 0], sizes = [8, 128], strides = [1, 1]} : vector<8x192xf32> to vector<8x128xf32>
    %24 = arith.addf %14, %23 : vector<8x128xf32>
    %25 = vector.extract_strided_slice %22 {offsets = [0, 128], sizes = [8, 64], strides = [1, 1]} : vector<8x192xf32> to vector<8x64xf32>
    %cst_13 = arith.constant 0.000000e+00 : f32
    %26 = vector.broadcast %cst_13 : f32 to vector<8x64xf32>
    %27 = arith.maximumf %25, %26 : vector<8x64xf32>
    %c0_14 = arith.constant 0 : index
    %c0_15 = arith.constant 0 : index
    %28 = vector.load %arg5[%c0_14, %c0_15] : memref<64x160xf32, #tpu.memory_space<vmem>>, vector<64x160xf32>
    %cst_16 = arith.constant dense<0.000000e+00> : vector<8x160xf32>
    %29 = tpu.matmul %27, %28, %cst_16 {dimension_numbers = #tpu.dot_dimension_numbers<[1], [0], [0], [1], [0, 0, 1, 1], [], []>} : vector<8x64xf32>, vector<64x160xf32>, vector<8x160xf32> -> vector<8x160xf32>
    %30 = vector.extract_strided_slice %0 {offsets = [3, 0], sizes = [1, 160], strides = [1, 1]} : vector<8x256xf32> to vector<1x160xf32>
    %31 = vector.broadcast %30 : vector<1x160xf32> to vector<8x160xf32>
    %32 = arith.addf %29, %31 : vector<8x160xf32>
    %33 = vector.extract_strided_slice %32 {offsets = [0, 0], sizes = [8, 128], strides = [1, 1]} : vector<8x160xf32> to vector<8x128xf32>
    %34 = arith.addf %24, %33 : vector<8x128xf32>
    %35 = vector.extract_strided_slice %32 {offsets = [0, 128], sizes = [8, 32], strides = [1, 1]} : vector<8x160xf32> to vector<8x32xf32>
    %cst_17 = arith.constant 0.000000e+00 : f32
    %36 = vector.broadcast %cst_17 : f32 to vector<8x32xf32>
    %37 = arith.maximumf %35, %36 : vector<8x32xf32>
    %c0_18 = arith.constant 0 : index
    %c0_19 = arith.constant 0 : index
    %38 = vector.load %arg6[%c0_18, %c0_19] : memref<32x128xf32, #tpu.memory_space<vmem>>, vector<32x128xf32>
    %cst_20 = arith.constant dense<0.000000e+00> : vector<8x128xf32>
    %39 = tpu.matmul %37, %38, %cst_20 {dimension_numbers = #tpu.dot_dimension_numbers<[1], [0], [0], [1], [0, 0, 1, 1], [], []>} : vector<8x32xf32>, vector<32x128xf32>, vector<8x128xf32> -> vector<8x128xf32>
    %40 = arith.addf %34, %39 : vector<8x128xf32>
    %cst_21 = arith.constant 0.000000e+00 : f32
    %41 = vector.broadcast %cst_21 : f32 to vector<8x128xf32>
    %42 = arith.maximumf %40, %41 : vector<8x128xf32>
    %c0_22 = arith.constant 0 : index
    %c0_23 = arith.constant 0 : index
    %43 = vector.load %arg7[%c0_22, %c0_23] : memref<128x128xf32, #tpu.memory_space<vmem>>, vector<128x128xf32>
    %cst_24 = arith.constant dense<0.000000e+00> : vector<8x128xf32>
    %44 = tpu.matmul %42, %43, %cst_24 {dimension_numbers = #tpu.dot_dimension_numbers<[1], [0], [0], [1], [0, 0, 1, 1], [], []>} : vector<8x128xf32>, vector<128x128xf32>, vector<8x128xf32> -> vector<8x128xf32>
    %45 = vector.extract_strided_slice %0 {offsets = [4, 0], sizes = [1, 128], strides = [1, 1]} : vector<8x256xf32> to vector<1x128xf32>
    %46 = vector.broadcast %45 : vector<1x128xf32> to vector<8x128xf32>
    %47 = arith.addf %44, %46 : vector<8x128xf32>
    %48 = tpu.iota {dimensions = array<i32: 1>} : vector<8x128xi32>
    %c4_i32 = arith.constant 4 : i32
    %49 = vector.broadcast %c4_i32 : i32 to vector<8x128xi32>
    %50 = arith.cmpi slt, %48, %49 : vector<8x128xi32>
    %cst_25 = arith.constant 0xFF800000 : f32
    %51 = vector.broadcast %cst_25 : f32 to vector<8x128xf32>
    %52 = arith.select %50, %47, %51 : vector<8x128xi1>, vector<8x128xf32>
    %cst_26 = arith.constant dense<0xFF800000> : vector<8xf32>
    %53 = vector.multi_reduction <maximumf>, %52, %cst_26 [1] : vector<8x128xf32> to vector<8xf32>
    %54 = vector.shape_cast %53 : vector<8xf32> to vector<8x1xf32>
    %55 = vector.broadcast %54 : vector<8x1xf32> to vector<8x128xf32>
    %56 = arith.subf %52, %55 : vector<8x128xf32>
    %57 = math.exp %56 : vector<8x128xf32>
    %cst_27 = arith.constant dense<0.000000e+00> : vector<8xf32>
    %58 = vector.multi_reduction <add>, %57, %cst_27 [1] : vector<8x128xf32> to vector<8xf32>
    %59 = vector.shape_cast %58 : vector<8xf32> to vector<8x1xf32>
    %60 = tpu.reciprocal %59 {approx = true} : vector<8x1xf32> -> vector<8x1xf32>
    %61 = vector.broadcast %60 : vector<8x1xf32> to vector<8x128xf32>
    %62 = arith.mulf %57, %61 : vector<8x128xf32>
    %c4_i32_28 = arith.constant 4 : i32
    %63 = vector.broadcast %c4_i32_28 : i32 to vector<8x128xi32>
    %64 = arith.cmpi eq, %48, %63 : vector<8x128xi32>
    %65 = arith.select %64, %47, %62 : vector<8x128xi1>, vector<8x128xf32>
    %c0_29 = arith.constant 0 : index
    %c0_30 = arith.constant 0 : index
    %66 = vector.load %arg9[%c0_29, %c0_30] : memref<8x128xf32, #tpu.memory_space<vmem>>, vector<8x128xf32>
    tpu.vector_store %arg9[%c0_29, %c0_30], %65 {strides = array<i32>} : memref<8x128xf32, #tpu.memory_space<vmem>>, vector<8x128xf32>,
    return
  }
  func.func @transform_0(%arg0: i32) -> (i32, i32) {
    %c0_i32 = arith.constant 0 : i32
    %c0_i32_0 = arith.constant 0 : i32
    return %arg0, %c0_i32 : i32, i32
  }
  func.func @transform_1(%arg0: i32) -> (i32, i32) {
    %c0_i32 = arith.constant 0 : i32
    %c0_i32_0 = arith.constant 0 : i32
    %c0_i32_1 = arith.constant 0 : i32
    return %c0_i32, %c0_i32_0 : i32, i32
  }
  func.func @transform_2(%arg0: i32) -> (i32, i32) {
    %c0_i32 = arith.constant 0 : i32
    %c0_i32_0 = arith.constant 0 : i32
    %c0_i32_1 = arith.constant 0 : i32
    return %c0_i32, %c0_i32_0 : i32, i32
  }
  func.func @transform_3(%arg0: i32) -> (i32, i32) {
    %c0_i32 = arith.constant 0 : i32
    %c0_i32_0 = arith.constant 0 : i32
    %c0_i32_1 = arith.constant 0 : i32
    return %c0_i32, %c0_i32_0 : i32, i32
  }
  func.func @transform_4(%arg0: i32) -> (i32, i32) {
    %c0_i32 = arith.constant 0 : i32
    %c0_i32_0 = arith.constant 0 : i32
    %c0_i32_1 = arith.constant 0 : i32
    return %c0_i32, %c0_i32_0 : i32, i32
  }
  func.func @transform_5(%arg0: i32) -> (i32, i32) {
    %c0_i32 = arith.constant 0 : i32
    %c0_i32_0 = arith.constant 0 : i32
    %c0_i32_1 = arith.constant 0 : i32
    return %c0_i32, %c0_i32_0 : i32, i32
  }
  func.func @transform_6(%arg0: i32) -> (i32, i32) {
    %c0_i32 = arith.constant 0 : i32
    %c0_i32_0 = arith.constant 0 : i32
    %c0_i32_1 = arith.constant 0 : i32
    return %c0_i32, %c0_i32_0 : i32, i32
  }
  func.func @transform_7(%arg0: i32) -> (i32, i32) {
    %c0_i32 = arith.constant 0 : i32
    %c0_i32_0 = arith.constant 0 : i32
    %c0_i32_1 = arith.constant 0 : i32
    return %c0_i32, %c0_i32_0 : i32, i32
  }
  func.func @transform_8(%arg0: i32) -> (i32, i32) {
    %c0_i32 = arith.constant 0 : i32
    %c0_i32_0 = arith.constant 0 : i32
    return %arg0, %c0_i32 : i32, i32
  }
}

</mosaic_0001>

<llo_original>
// kernel: tpu_custom_call.1
$region0: #{tpu_custom_call.1}
  #allocation0 [shape = 'u32[]', space=smem, size = 0x4, offset = 0x4, fixed_abs, tag = 'smem constant byte address 0x4 - core index']
  #allocation1 [shape = 'u32[144,128]{1,0:T(1,128)}', space=vmem, size = 0x12000, scoped, tag = 'internal scratch']
  %s0 = inlined_call_operand.vmem [shape: f32[8,8], index: 0, kind: input, shape index: {}]
  %s1 = inlined_call_operand.vmem [shape: f32[8,256], index: 1, kind: input, shape index: {}]
  %s2 = inlined_call_operand.hbm [shape: f32[256,256], index: 2, kind: input, shape index: {}]
  %s3 = inlined_call_operand.vmem [shape: f32[128,192], index: 3, kind: input, shape index: {}]
  %s4 = inlined_call_operand.vmem [shape: f32[64,160], index: 4, kind: input, shape index: {}]
  %s5 = inlined_call_operand.vmem [shape: f32[32,128], index: 5, kind: input, shape index: {}]
  %s6 = inlined_call_operand.vmem [shape: f32[128,128], index: 6, kind: input, shape index: {}]
  %s7 = inlined_call_operand.vmem [shape: f32[8,256], index: 7, kind: input, shape index: {}]
  %s8 = inlined_call_operand.hbm [shape: f32[8,128], index: 8, kind: output, shape index: {}]
  %s9 = sld [smem:[#allocation0]]
  $region46: #{tpu_custom_call.1} parent=0
    _
  %s11 = ssub.s32 1, %s9
  %s12 = scalar_select 0, %s11, %s9
  $region1: #{tpu_custom_call.1} parent=0
    #allocation2 [shape = 'u8[262144]{0}', space=vmem, size = 0x40000, scoped, tag = 'input window, operand 2, single buffered']
    #allocation3 [shape = 's32[1]{0}', space=sflag, size = 0x4, scoped, tag = 'scoped memory for tpu_custom_call.1']
    #allocation4 [shape = 's32[1]{0}', space=sflag, size = 0x4, scoped, tag = 'scoped memory for tpu_custom_call.1']
    #allocation5 [shape = 'u8[4096]{0}', space=vmem, size = 0x1000, scoped, tag = 'output window, operand 0, single buffered']
    %13 = vsyncpa [#allocation3], 0
    %14 = vsyncpa [#allocation4], 0
    // Predicated region
    $region2: #{tpu_custom_call.1} parent=1 // pred_check
      _
    $region3: #{tpu_custom_call.1} parent=1 // pred_check_branch
      %16 = sbr.rel (0) target = $region5
    $region4: #{tpu_custom_call.1} parent=1 // pred_region
      _
    $region5: #{tpu_custom_call.1} parent=1 // pred_fallthru
      _
    // Predicated region
    $region6: #{tpu_custom_call.1} parent=1 // pred_check
      _
    $region7: #{tpu_custom_call.1} parent=1 // pred_check_branch
      %18 = sbr.rel (0) target = $region9
    $region8: #{tpu_custom_call.1} parent=1 // pred_region
      _
    $region9: #{tpu_custom_call.1} parent=1 // pred_fallthru
      _
    // Predicated region
    $region10: #{tpu_custom_call.1} parent=1 // pred_check
      _
    $region11: #{tpu_custom_call.1} parent=1 // pred_check_branch
      %20 = sbr.rel (0) target = $region13
    $region12: #{tpu_custom_call.1} parent=1 // pred_region
      %s22 = ssub.s32 8192, 8192
      %23 = vsyncadd [#allocation3], %s22
      %s24 = sshll.u32 [#allocation2], 4
      %s25 = int_to_ptr.vmem [resolvable:$true] %s24
      %30 = dma.hbm_to_vmem [thread:$0]  %s2, 8192, %s25, [#allocation3], 256, 256, 16
    $region13: #{tpu_custom_call.1} parent=1 // pred_fallthru
      _
    // Predicated region
    $region14: #{tpu_custom_call.1} parent=1 // pred_check
      _
    $region15: #{tpu_custom_call.1} parent=1 // pred_check_branch
      %32 = sbr.rel (0) target = $region17
    $region16: #{tpu_custom_call.1} parent=1 // pred_region
      _
    $region17: #{tpu_custom_call.1} parent=1 // pred_fallthru
      _
    // Predicated region
    $region18: #{tpu_custom_call.1} parent=1 // pred_check
      _
    $region19: #{tpu_custom_call.1} parent=1 // pred_check_branch
      %34 = sbr.rel (0) target = $region21
    $region20: #{tpu_custom_call.1} parent=1 // pred_region
      _
    $region21: #{tpu_custom_call.1} parent=1 // pred_fallthru
      _
    // Predicated region
    $region22: #{tpu_custom_call.1} parent=1 // pred_check
      _
    $region23: #{tpu_custom_call.1} parent=1 // pred_check_branch
      %36 = sbr.rel (0) target = $region25
    $region24: #{tpu_custom_call.1} parent=1 // pred_region
      _
    $region25: #{tpu_custom_call.1} parent=1 // pred_fallthru
      _
    // Predicated region
    $region26: #{tpu_custom_call.1} parent=1 // pred_check
      _
    $region27: #{tpu_custom_call.1} parent=1 // pred_check_branch
      %38 = sbr.rel (0) target = $region29
    $region28: #{tpu_custom_call.1} parent=1 // pred_region
      _
    $region29: #{tpu_custom_call.1} parent=1 // pred_fallthru
      _
    // Predicated region
    $region30: #{tpu_custom_call.1} parent=1 // pred_check
      _
    $region31: #{tpu_custom_call.1} parent=1 // pred_check_branch
      %40 = sbr.rel (0) target = $region33
    $region32: #{tpu_custom_call.1} parent=1 // pred_region
      _
    $region33: #{tpu_custom_call.1} parent=1 // pred_fallthru
      _
    // Predicated region
    $region34: #{tpu_custom_call.1} parent=1 // pred_check
      _
    $region35: #{tpu_custom_call.1} parent=1 // pred_check_branch
      %42 = sbr.rel (0) target = $region37
    $region36: #{tpu_custom_call.1} parent=1 // pred_region
      %43 = dma.done [#allocation3], 8192
    $region37: #{tpu_custom_call.1} parent=1 // pred_fallthru
      _
    %v44 = vld [vmem:[%s7] sm:$0xff]
    %v45 = vld [vmem:[%s7 + $0x8] sm:$0xff]
    %v46 = vld [vmem:[%s0] sm:$0xff]
    %v47 = vld [vmem:[%s1] sm:$0xff]
    %v48 = vld [vmem:[%s1 + $0x8] sm:$0xff]
    %v49 = vlaneseq
    %v50 = vshrl.u32 %v49, 7
    %v51 = vsub.s32 0, %v50
    %v52 = vrot.slane %v44, %v51
    %v53 = vlaneseq
    %v54 = vshrl.u32 %v53, 7
    %v55 = vsub.s32 0, %v54
    %v56 = vrot.slane %v45, %v55
    %vm57 = vcmask 64512
    %v59 = vsel %vm57, %v46, 0
    %61 = vmatprep.subr.mxu0 %v48
    %62 = vmatpush1.msra.mxu0 %v47
    %63 = vmatprep.subr.mxu0 0.0
    %64 = vmatpush1.msra.mxu0 0.0
    %65 = vmatprep.subr.mxu0 0.0
    %66 = vmatpush1.msra.mxu0 0.0
    %67 = vmatprep.subr.mxu0 0.0
    %68 = vmatpush1.msra.mxu0 0.0
    %69 = vmatprep.subr.mxu0 0.0
    %70 = vmatpush1.msra.mxu0 0.0
    %71 = vmatprep.subr.mxu0 0.0
    %72 = vmatpush1.msra.mxu0 0.0
    %73 = vmatprep.subr.mxu0 0.0
    %74 = vmatpush1.msra.mxu0 0.0
    %75 = vmatprep.subr.mxu0 0.0
    %76 = vmatpush1.msra.mxu0 0.0
    %77 = vmatprep.subr.mxu0 0.0
    %78 = vmatpush1.msra.mxu0 0.0
    %79 = vmatprep.subr.mxu0 0.0
    %80 = vmatpush1.msra.mxu0 0.0
    %81 = vmatprep.subr.mxu0 0.0
    %82 = vmatpush1.msra.mxu0 0.0
    %83 = vmatprep.subr.mxu0 0.0
    %84 = vmatpush1.msra.mxu0 0.0
    %85 = vmatprep.subr.mxu0 0.0
    %86 = vmatpush1.msra.mxu0 0.0
    %87 = vmatprep.subr.mxu0 0.0
    %88 = vmatpush1.msra.mxu0 0.0
    %89 = vmatprep.subr.mxu0 0.0
    %90 = vmatpush1.msra.mxu0 0.0
    %91 = vmatprep.subr.mxu0 0.0
    %92 = vmatpush1.msra.mxu0 0.0
    %93 = vmatprep.subr.mxu0 0.0
    %94 = vmatpush1.msra.mxu0 0.0
    %95 = vmatprep.subr.mxu0 0.0
    %96 = vmatpush1.msra.mxu0 0.0
    %97 = vmatprep.subr.mxu0 0.0
    %98 = vmatpush1.msra.mxu0 0.0
    %99 = vmatprep.subr.mxu0 0.0
    %100 = vmatpush1.msra.mxu0 0.0
    %101 = vmatprep.subr.mxu0 0.0
    %102 = vmatpush1.msra.mxu0 0.0
    %103 = vmatprep.subr.mxu0 0.0
    %104 = vmatpush1.msra.mxu0 0.0
    %105 = vmatprep.subr.mxu0 0.0
    %106 = vmatpush1.msra.mxu0 0.0
    %107 = vmatprep.subr.mxu0 0.0
    %108 = vmatpush1.msra.mxu0 0.0
    %109 = vmatprep.subr.mxu0 0.0
    %110 = vmatpush1.msra.mxu0 0.0
    %111 = vmatprep.subr.mxu0 0.0
    %112 = vmatpush1.msra.mxu0 0.0
    %113 = vmatprep.subr.mxu0 0.0
    %114 = vmatpush1.msra.mxu0 0.0
    %115 = vmatprep.subr.mxu0 0.0
    %116 = vmatpush1.msra.mxu0 0.0
    %117 = vmatprep.subr.mxu0 0.0
    %118 = vmatpush1.msra.mxu0 0.0
    %119 = vmatprep.subr.mxu0 0.0
    %120 = vmatpush1.msra.mxu0 0.0
    %121 = vmatprep.subr.mxu0 0.0
    %122 = vmatpush1.msra.mxu0 0.0
    %123 = vmatprep.subr.mxu0 0.0
    %124 = vmatpush1.msra.mxu0 0.0
    %125 = vmatprep.mubr.f32.mxu0 0.0
    %126 = vmatmul.mubr.f32.gmra.mrb[0].mxu0 %v59
    %v127 = vpop.f32.mrb[0].mxu0
    %v128 = vadd.f32 %v52, %v127
    %v129 = vpop.f32.mrb[0].mxu0
    %v130 = vadd.f32 %v56, %v129
    %131 = vdwg.mxu0
    %v132 = vmax.f32 %v128, 0.0
    %v133 = vmax.f32 %v130, 0.0
    %v134 = vld [vmem:[#allocation2] sm:$0xff]
    %v135 = vld [vmem:[#allocation2 + $0x8] sm:$0xff]
    %v136 = vld [vmem:[#allocation2 + $0x10] sm:$0xff]
    %v137 = vld [vmem:[#allocation2 + $0x18] sm:$0xff]
    %v138 = vld [vmem:[#allocation2 + $0x20] sm:$0xff]
    %v139 = vld [vmem:[#allocation2 + $0x28] sm:$0xff]
    %v140 = vld [vmem:[#allocation2 + $0x30] sm:$0xff]
    %v141 = vld [vmem:[#allocation2 + $0x38] sm:$0xff]
    %v142 = vld [vmem:[#allocation2 + $0x40] sm:$0xff]
    %v143 = vld [vmem:[#allocation2 + $0x48] sm:$0xff]
    %v144 = vld [vmem:[#allocation2 + $0x50] sm:$0xff]
    %v145 = vld [vmem:[#allocation2 + $0x58] sm:$0xff]
    %v146 = vld [vmem:[#allocation2 + $0x60] sm:$0xff]
    %v147 = vld [vmem:[#allocation2 + $0x68] sm:$0xff]
    %v148 = vld [vmem:[#allocation2 + $0x70] sm:$0xff]
    %v149 = vld [vmem:[#allocation2 + $0x78] sm:$0xff]
    %v150 = vld [vmem:[#allocation2 + $0x80] sm:$0xff]
    %v151 = vld [vmem:[#allocation2 + $0x88] sm:$0xff]
    %v152 = vld [vmem:[#allocation2 + $0x90] sm:$0xff]
    %v153 = vld [vmem:[#allocation2 + $0x98] sm:$0xff]
    %v154 = vld [vmem:[#allocation2 + $0xa0] sm:$0xff]
    %v155 = vld [vmem:[#allocation2 + $0xa8] sm:$0xff]
    %v156 = vld [vmem:[#allocation2 + $0xb0] sm:$0xff]
    %v157 = vld [vmem:[#allocation2 + $0xb8] sm:$0xff]
    %v158 = vld [vmem:[#allocation2 + $0xc0] sm:$0xff]
    %v159 = vld [vmem:[#allocation2 + $0xc8] sm:$0xff]
    %v160 = vld [vmem:[#allocation2 + $0xd0] sm:$0xff]
    %v161 = vld [vmem:[#allocation2 + $0xd8] sm:$0xff]
    %v162 = vld [vmem:[#allocation2 + $0xe0] sm:$0xff]
    %v163 = vld [vmem:[#allocation2 + $0xe8] sm:$0xff]
    %v164 = vld [vmem:[#allocation2 + $0xf0] sm:$0xff]
    %v165 = vld [vmem:[#allocation2 + $0xf8] sm:$0xff]
    %v166 = vld [vmem:[#allocation2 + $0x100] sm:$0xff]
    %v167 = vld [vmem:[#allocation2 + $0x108] sm:$0xff]
    %v168 = vld [vmem:[#allocation2 + $0x110] sm:$0xff]
    %v169 = vld [vmem:[#allocation2 + $0x118] sm:$0xff]
    %v170 = vld [vmem:[#allocation2 + $0x120] sm:$0xff]
    %v171 = vld [vmem:[#allocation2 + $0x128] sm:$0xff]
    %v172 = vld [vmem:[#allocation2 + $0x130] sm:$0xff]
    %v173 = vld [vmem:[#allocation2 + $0x138] sm:$0xff]
    %v174 = vld [vmem:[#allocation2 + $0x140] sm:$0xff]
    %v175 = vld [vmem:[#allocation2 + $0x148] sm:$0xff]
    %v176 = vld [vmem:[#allocation2 + $0x150] sm:$0xff]
    %v177 = vld [vmem:[#allocation2 + $0x158] sm:$0xff]
    %v178 = vld [vmem:[#allocation2 + $0x160] sm:$0xff]
    %v179 = vld [vmem:[#allocation2 + $0x168] sm:$0xff]
    %v180 = vld [vmem:[#allocation2 + $0x170] sm:$0xff]
    %v181 = vld [vmem:[#allocation2 + $0x178] sm:$0xff]
    %v182 = vld [vmem:[#allocation2 + $0x180] sm:$0xff]
    %v183 = vld [vmem:[#allocation2 + $0x188] sm:$0xff]
    %v184 = vld [vmem:[#allocation2 + $0x190] sm:$0xff]
    %v185 = vld [vmem:[#allocation2 + $0x198] sm:$0xff]
    %v186 = vld [vmem:[#allocation2 + $0x1a0] sm:$0xff]
    %v187 = vld [vmem:[#allocation2 + $0x1a8] sm:$0xff]
    %v188 = vld [vmem:[#allocation2 + $0x1b0] sm:$0xff]
    %v189 = vld [vmem:[#allocation2 + $0x1b8] sm:$0xff]
    %v190 = vld [vmem:[#allocation2 + $0x1c0] sm:$0xff]
    %v191 = vld [vmem:[#allocation2 + $0x1c8] sm:$0xff]
    %v192 = vld [vmem:[#allocation2 + $0x1d0] sm:$0xff]
    %v193 = vld [vmem:[#allocation2 + $0x1d8] sm:$0xff]
    %v194 = vld [vmem:[#allocation2 + $0x1e0] sm:$0xff]
    %v195 = vld [vmem:[#allocation2 + $0x1e8] sm:$0xff]
    %v196 = vld [vmem:[#allocation2 + $0x1f0] sm:$0xff]
    %v197 = vld [vmem:[#allocation2 + $0x1f8] sm:$0xff]
    %v198 = vlaneseq
    %v199 = vshrl.u32 %v198, 7
    %v200 = vsub.s32 1, %v199
    %v201 = vrot.slane %v44, %v200
    %v202 = vlaneseq
    %v203 = vshrl.u32 %v202, 7
    %v204 = vsub.s32 1, %v203
    %v205 = vrot.slane %v45, %v204
    %206 = vmatprep.subr.mxu0 %v135
    %207 = vmatpush1.msra.mxu0 %v134
    %208 = vmatprep.subr.mxu0 %v137
    %209 = vmatpush1.msra.mxu0 %v136
    %210 = vmatprep.subr.mxu0 %v139
    %211 = vmatpush1.msra.mxu0 %v138
    %212 = vmatprep.subr.mxu0 %v141
    %213 = vmatpush1.msra.mxu0 %v140
    %214 = vmatprep.subr.mxu0 %v143
    %215 = vmatpush1.msra.mxu0 %v142
    %216 = vmatprep.subr.mxu0 %v145
    %217 = vmatpush1.msra.mxu0 %v144
    %218 = vmatprep.subr.mxu0 %v147
    %219 = vmatpush1.msra.mxu0 %v146
    %220 = vmatprep.subr.mxu0 %v149
    %221 = vmatpush1.msra.mxu0 %v148
    %222 = vmatprep.subr.mxu0 %v151
    %223 = vmatpush1.msra.mxu0 %v150
    %224 = vmatprep.subr.mxu0 %v153
    %225 = vmatpush1.msra.mxu0 %v152
    %226 = vmatprep.subr.mxu0 %v155
    %227 = vmatpush1.msra.mxu0 %v154
    %228 = vmatprep.subr.mxu0 %v157
    %229 = vmatpush1.msra.mxu0 %v156
    %230 = vmatprep.subr.mxu0 %v159
    %231 = vmatpush1.msra.mxu0 %v158
    %232 = vmatprep.subr.mxu0 %v161
    %233 = vmatpush1.msra.mxu0 %v160
    %234 = vmatprep.subr.mxu0 %v163
    %235 = vmatpush1.msra.mxu0 %v162
    %236 = vmatprep.subr.mxu0 %v165
    %237 = vmatpush1.msra.mxu0 %v164
    %238 = vmatprep.subr.mxu0 %v167
    %239 = vmatpush1.msra.mxu0 %v166
    %240 = vmatprep.subr.mxu0 %v169
    %241 = vmatpush1.msra.mxu0 %v168
    %242 = vmatprep.subr.mxu0 %v171
    %243 = vmatpush1.msra.mxu0 %v170
    %244 = vmatprep.subr.mxu0 %v173
    %245 = vmatpush1.msra.mxu0 %v172
    %246 = vmatprep.subr.mxu0 %v175
    %247 = vmatpush1.msra.mxu0 %v174
    %248 = vmatprep.subr.mxu0 %v177
    %249 = vmatpush1.msra.mxu0 %v176
    %250 = vmatprep.subr.mxu0 %v179
    %251 = vmatpush1.msra.mxu0 %v178
    %252 = vmatprep.subr.mxu0 %v181
    %253 = vmatpush1.msra.mxu0 %v180
    %254 = vmatprep.subr.mxu0 %v183
    %255 = vmatpush1.msra.mxu0 %v182
    %256 = vmatprep.subr.mxu0 %v185
    %257 = vmatpush1.msra.mxu0 %v184
    %258 = vmatprep.subr.mxu0 %v187
    %259 = vmatpush1.msra.mxu0 %v186
    %260 = vmatprep.subr.mxu0 %v189
    %261 = vmatpush1.msra.mxu0 %v188
    %262 = vmatprep.subr.mxu0 %v191
    %263 = vmatpush1.msra.mxu0 %v190
    %264 = vmatprep.subr.mxu0 %v193
    %265 = vmatpush1.msra.mxu0 %v192
    %266 = vmatprep.subr.mxu0 %v195
    %267 = vmatpush1.msra.mxu0 %v194
    %268 = vmatprep.subr.mxu0 %v197
    %269 = vmatpush1.msra.mxu0 %v196
    %270 = vmatprep.mubr.f32.mxu0 %v133
    %271 = vmatmul.mubr.f32.gmra.mrb[0].mxu0 %v132
    %v272 = vpop.f32.mrb[0].mxu0
    %v273 = vadd.f32 %v201, %v272
    %v274 = vpop.f32.mrb[0].mxu0
    %v275 = vadd.f32 %v205, %v274
    %276 = vdwg.mxu0
    %v277 = vmax.f32 %v275, 0.0
    %v278 = vld [vmem:[%s3] sm:$0xff]
    %v279 = vld [vmem:[%s3 + $0x8] sm:$0xff]
    %v280 = vld [vmem:[%s3 + $0x10] sm:$0xff]
    %v281 = vld [vmem:[%s3 + $0x18] sm:$0xff]
    %v282 = vld [vmem:[%s3 + $0x20] sm:$0xff]
    %v283 = vld [vmem:[%s3 + $0x28] sm:$0xff]
    %v284 = vld [vmem:[%s3 + $0x30] sm:$0xff]
    %v285 = vld [vmem:[%s3 + $0x38] sm:$0xff]
    %v286 = vld [vmem:[%s3 + $0x40] sm:$0xff]
    %v287 = vld [vmem:[%s3 + $0x48] sm:$0xff]
    %v288 = vld [vmem:[%s3 + $0x50] sm:$0xff]
    %v289 = vld [vmem:[%s3 + $0x58] sm:$0xff]
    %v290 = vld [vmem:[%s3 + $0x60] sm:$0xff]
    %v291 = vld [vmem:[%s3 + $0x68] sm:$0xff]
    %v292 = vld [vmem:[%s3 + $0x70] sm:$0xff]
    %v293 = vld [vmem:[%s3 + $0x78] sm:$0xff]
    %v294 = vld [vmem:[%s3 + $0x80] sm:$0xff]
    %v295 = vld [vmem:[%s3 + $0x88] sm:$0xff]
    %v296 = vld [vmem:[%s3 + $0x90] sm:$0xff]
    %v297 = vld [vmem:[%s3 + $0x98] sm:$0xff]
    %v298 = vld [vmem:[%s3 + $0xa0] sm:$0xff]
    %v299 = vld [vmem:[%s3 + $0xa8] sm:$0xff]
    %v300 = vld [vmem:[%s3 + $0xb0] sm:$0xff]
    %v301 = vld [vmem:[%s3 + $0xb8] sm:$0xff]
    %v302 = vld [vmem:[%s3 + $0xc0] sm:$0xff]
    %v303 = vld [vmem:[%s3 + $0xc8] sm:$0xff]
    %v304 = vld [vmem:[%s3 + $0xd0] sm:$0xff]
    %v305 = vld [vmem:[%s3 + $0xd8] sm:$0xff]
    %v306 = vld [vmem:[%s3 + $0xe0] sm:$0xff]
    %v307 = vld [vmem:[%s3 + $0xe8] sm:$0xff]
    %v308 = vld [vmem:[%s3 + $0xf0] sm:$0xff]
    %v309 = vld [vmem:[%s3 + $0xf8] sm:$0xff]
    %v310 = vlaneseq
    %v311 = vshrl.u32 %v310, 7
    %v312 = vsub.s32 2, %v311
    %v313 = vrot.slane %v44, %v312
    %v314 = vlaneseq
    %v315 = vshrl.u32 %v314, 7
    %v316 = vsub.s32 2, %v315
    %v317 = vrot.slane %v45, %v316
    %318 = vmatprep.subr.mxu0 %v279
    %319 = vmatpush1.msra.mxu0 %v278
    %320 = vmatprep.subr.mxu0 %v281
    %321 = vmatpush1.msra.mxu0 %v280
    %322 = vmatprep.subr.mxu0 %v283
    %323 = vmatpush1.msra.mxu0 %v282
    %324 = vmatprep.subr.mxu0 %v285
    %325 = vmatpush1.msra.mxu0 %v284
    %326 = vmatprep.subr.mxu0 %v287
    %327 = vmatpush1.msra.mxu0 %v286
    %328 = vmatprep.subr.mxu0 %v289
    %329 = vmatpush1.msra.mxu0 %v288
    %330 = vmatprep.subr.mxu0 %v291
    %331 = vmatpush1.msra.mxu0 %v290
    %332 = vmatprep.subr.mxu0 %v293
    %333 = vmatpush1.msra.mxu0 %v292
    %334 = vmatprep.subr.mxu0 %v295
    %335 = vmatpush1.msra.mxu0 %v294
    %336 = vmatprep.subr.mxu0 %v297
    %337 = vmatpush1.msra.mxu0 %v296
    %338 = vmatprep.subr.mxu0 %v299
    %339 = vmatpush1.msra.mxu0 %v298
    %340 = vmatprep.subr.mxu0 %v301
    %341 = vmatpush1.msra.mxu0 %v300
    %342 = vmatprep.subr.mxu0 %v303
    %343 = vmatpush1.msra.mxu0 %v302
    %344 = vmatprep.subr.mxu0 %v305
    %345 = vmatpush1.msra.mxu0 %v304
    %346 = vmatprep.subr.mxu0 %v307
    %347 = vmatpush1.msra.mxu0 %v306
    %348 = vmatprep.subr.mxu0 %v309
    %349 = vmatpush1.msra.mxu0 %v308
    %350 = vmatprep.subr.mxu0 0.0
    %351 = vmatpush1.msra.mxu0 0.0
    %352 = vmatprep.subr.mxu0 0.0
    %353 = vmatpush1.msra.mxu0 0.0
    %354 = vmatprep.subr.mxu0 0.0
    %355 = vmatpush1.msra.mxu0 0.0
    %356 = vmatprep.subr.mxu0 0.0
    %357 = vmatpush1.msra.mxu0 0.0
    %358 = vmatprep.subr.mxu0 0.0
    %359 = vmatpush1.msra.mxu0 0.0
    %360 = vmatprep.subr.mxu0 0.0
    %361 = vmatpush1.msra.mxu0 0.0
    %362 = vmatprep.subr.mxu0 0.0
    %363 = vmatpush1.msra.mxu0 0.0
    %364 = vmatprep.subr.mxu0 0.0
    %365 = vmatpush1.msra.mxu0 0.0
    %366 = vmatprep.subr.mxu0 0.0
    %367 = vmatpush1.msra.mxu0 0.0
    %368 = vmatprep.subr.mxu0 0.0
    %369 = vmatpush1.msra.mxu0 0.0
    %370 = vmatprep.subr.mxu0 0.0
    %371 = vmatpush1.msra.mxu0 0.0
    %372 = vmatprep.subr.mxu0 0.0
    %373 = vmatpush1.msra.mxu0 0.0
    %374 = vmatprep.subr.mxu0 0.0
    %375 = vmatpush1.msra.mxu0 0.0
    %376 = vmatprep.subr.mxu0 0.0
    %377 = vmatpush1.msra.mxu0 0.0
    %378 = vmatprep.subr.mxu0 0.0
    %379 = vmatpush1.msra.mxu0 0.0
    %380 = vmatprep.subr.mxu0 0.0
    %381 = vmatpush1.msra.mxu0 0.0
    %382 = vmatprep.mubr.f32.mxu0 0.0
    %383 = vmatmul.mubr.f32.gmra.mrb[0].mxu0 %v277
    %v384 = vpop.f32.mrb[0].mxu0
    %v385 = vadd.f32 %v313, %v384
    %v386 = vpop.f32.mrb[0].mxu0
    %v387 = vadd.f32 %v317, %v386
    %388 = vdwg.mxu0
    %v389 = vadd.f32 %v273, %v385
    %v390 = vmax.f32 %v387, 0.0
    %v391 = vld [vmem:[%s4] sm:$0xff]
    %v392 = vld [vmem:[%s4 + $0x8] sm:$0xff]
    %v393 = vld [vmem:[%s4 + $0x10] sm:$0xff]
    %v394 = vld [vmem:[%s4 + $0x18] sm:$0xff]
    %v395 = vld [vmem:[%s4 + $0x20] sm:$0xff]
    %v396 = vld [vmem:[%s4 + $0x28] sm:$0xff]
    %v397 = vld [vmem:[%s4 + $0x30] sm:$0xff]
    %v398 = vld [vmem:[%s4 + $0x38] sm:$0xff]
    %v399 = vld [vmem:[%s4 + $0x40] sm:$0xff]
    %v400 = vld [vmem:[%s4 + $0x48] sm:$0xff]
    %v401 = vld [vmem:[%s4 + $0x50] sm:$0xff]
    %v402 = vld [vmem:[%s4 + $0x58] sm:$0xff]
    %v403 = vld [vmem:[%s4 + $0x60] sm:$0xff]
    %v404 = vld [vmem:[%s4 + $0x68] sm:$0xff]
    %v405 = vld [vmem:[%s4 + $0x70] sm:$0xff]
    %v406 = vld [vmem:[%s4 + $0x78] sm:$0xff]
    %v407 = vlaneseq
    %v408 = vshrl.u32 %v407, 7
    %v409 = vsub.s32 3, %v408
    %v410 = vrot.slane %v44, %v409
    %v411 = vlaneseq
    %v412 = vshrl.u32 %v411, 7
    %v413 = vsub.s32 3, %v412
    %v414 = vrot.slane %v45, %v413
    %vm415 = vcmask 523264
    %v417 = vsel %vm415, %v390, 0
    %419 = vmatprep.subr.mxu0 %v392
    %420 = vmatpush1.msra.mxu0 %v391
    %421 = vmatprep.subr.mxu0 %v394
    %422 = vmatpush1.msra.mxu0 %v393
    %423 = vmatprep.subr.mxu0 %v396
    %424 = vmatpush1.msra.mxu0 %v395
    %425 = vmatprep.subr.mxu0 %v398
    %426 = vmatpush1.msra.mxu0 %v397
    %427 = vmatprep.subr.mxu0 %v400
    %428 = vmatpush1.msra.mxu0 %v399
    %429 = vmatprep.subr.mxu0 %v402
    %430 = vmatpush1.msra.mxu0 %v401
    %431 = vmatprep.subr.mxu0 %v404
    %432 = vmatpush1.msra.mxu0 %v403
    %433 = vmatprep.subr.mxu0 %v406
    %434 = vmatpush1.msra.mxu0 %v405
    %435 = vmatprep.subr.mxu0 0.0
    %436 = vmatpush1.msra.mxu0 0.0
    %437 = vmatprep.subr.mxu0 0.0
    %438 = vmatpush1.msra.mxu0 0.0
    %439 = vmatprep.subr.mxu0 0.0
    %440 = vmatpush1.msra.mxu0 0.0
    %441 = vmatprep.subr.mxu0 0.0
    %442 = vmatpush1.msra.mxu0 0.0
    %443 = vmatprep.subr.mxu0 0.0
    %444 = vmatpush1.msra.mxu0 0.0
    %445 = vmatprep.subr.mxu0 0.0
    %446 = vmatpush1.msra.mxu0 0.0
    %447 = vmatprep.subr.mxu0 0.0
    %448 = vmatpush1.msra.mxu0 0.0
    %449 = vmatprep.subr.mxu0 0.0
    %450 = vmatpush1.msra.mxu0 0.0
    %451 = vmatprep.subr.mxu0 0.0
    %452 = vmatpush1.msra.mxu0 0.0
    %453 = vmatprep.subr.mxu0 0.0
    %454 = vmatpush1.msra.mxu0 0.0
    %455 = vmatprep.subr.mxu0 0.0
    %456 = vmatpush1.msra.mxu0 0.0
    %457 = vmatprep.subr.mxu0 0.0
    %458 = vmatpush1.msra.mxu0 0.0
    %459 = vmatprep.subr.mxu0 0.0
    %460 = vmatpush1.msra.mxu0 0.0
    %461 = vmatprep.subr.mxu0 0.0
    %462 = vmatpush1.msra.mxu0 0.0
    %463 = vmatprep.subr.mxu0 0.0
    %464 = vmatpush1.msra.mxu0 0.0
    %465 = vmatprep.subr.mxu0 0.0
    %466 = vmatpush1.msra.mxu0 0.0
    %467 = vmatprep.subr.mxu0 0.0
    %468 = vmatpush1.msra.mxu0 0.0
    %469 = vmatprep.subr.mxu0 0.0
    %470 = vmatpush1.msra.mxu0 0.0
    %471 = vmatprep.subr.mxu0 0.0
    %472 = vmatpush1.msra.mxu0 0.0
    %473 = vmatprep.subr.mxu0 0.0
    %474 = vmatpush1.msra.mxu0 0.0
    %475 = vmatprep.subr.mxu0 0.0
    %476 = vmatpush1.msra.mxu0 0.0
    %477 = vmatprep.subr.mxu0 0.0
    %478 = vmatpush1.msra.mxu0 0.0
    %479 = vmatprep.subr.mxu0 0.0
    %480 = vmatpush1.msra.mxu0 0.0
    %481 = vmatprep.subr.mxu0 0.0
    %482 = vmatpush1.msra.mxu0 0.0
    %483 = vmatprep.mubr.f32.mxu0 0.0
    %484 = vmatmul.mubr.f32.gmra.mrb[0].mxu0 %v417
    %v485 = vpop.f32.mrb[0].mxu0
    %v486 = vadd.f32 %v410, %v485
    %v487 = vpop.f32.mrb[0].mxu0
    %v488 = vadd.f32 %v414, %v487
    %489 = vdwg.mxu0
    %v490 = vadd.f32 %v389, %v486
    %v491 = vmax.f32 %v488, 0.0
    %v492 = vld [vmem:[%s5] sm:$0xff]
    %v493 = vld [vmem:[%s5 + $0x8] sm:$0xff]
    %v494 = vld [vmem:[%s5 + $0x10] sm:$0xff]
    %v495 = vld [vmem:[%s5 + $0x18] sm:$0xff]
    %vm496 = vcmask 261120
    %v498 = vsel %vm496, %v491, 0
    %500 = vmatprep.subr.mxu0 0.0
    %501 = vmatpush1.msra.mxu0 %v492
    %502 = vmatprep.subr.mxu0 0.0
    %503 = vmatpush1.msra.mxu0 %v493
    %504 = vmatprep.subr.mxu0 0.0
    %505 = vmatpush1.msra.mxu0 %v494
    %506 = vmatprep.subr.mxu0 0.0
    %507 = vmatpush1.msra.mxu0 %v495
    %508 = vmatprep.subr.mxu0 0.0
    %509 = vmatpush1.msra.mxu0 0.0
    %510 = vmatprep.subr.mxu0 0.0
    %511 = vmatpush1.msra.mxu0 0.0
    %512 = vmatprep.subr.mxu0 0.0
    %513 = vmatpush1.msra.mxu0 0.0
    %514 = vmatprep.subr.mxu0 0.0
    %515 = vmatpush1.msra.mxu0 0.0
    %516 = vmatprep.subr.mxu0 0.0
    %517 = vmatpush1.msra.mxu0 0.0
    %518 = vmatprep.subr.mxu0 0.0
    %519 = vmatpush1.msra.mxu0 0.0
    %520 = vmatprep.subr.mxu0 0.0
    %521 = vmatpush1.msra.mxu0 0.0
    %522 = vmatprep.subr.mxu0 0.0
    %523 = vmatpush1.msra.mxu0 0.0
    %524 = vmatprep.subr.mxu0 0.0
    %525 = vmatpush1.msra.mxu0 0.0
    %526 = vmatprep.subr.mxu0 0.0
    %527 = vmatpush1.msra.mxu0 0.0
    %528 = vmatprep.subr.mxu0 0.0
    %529 = vmatpush1.msra.mxu0 0.0
    %530 = vmatprep.subr.mxu0 0.0
    %531 = vmatpush1.msra.mxu0 0.0
    %532 = vmatprep.subr.mxu0 0.0
    %533 = vmatpush1.msra.mxu0 0.0
    %534 = vmatprep.subr.mxu0 0.0
    %535 = vmatpush1.msra.mxu0 0.0
    %536 = vmatprep.subr.mxu0 0.0
    %537 = vmatpush1.msra.mxu0 0.0
    %538 = vmatprep.subr.mxu0 0.0
    %539 = vmatpush1.msra.mxu0 0.0
    %540 = vmatprep.subr.mxu0 0.0
    %541 = vmatpush1.msra.mxu0 0.0
    %542 = vmatprep.subr.mxu0 0.0
    %543 = vmatpush1.msra.mxu0 0.0
    %544 = vmatprep.subr.mxu0 0.0
    %545 = vmatpush1.msra.mxu0 0.0
    %546 = vmatprep.subr.mxu0 0.0
    %547 = vmatpush1.msra.mxu0 0.0
    %548 = vmatprep.subr.mxu0 0.0
    %549 = vmatpush1.msra.mxu0 0.0
    %550 = vmatprep.subr.mxu0 0.0
    %551 = vmatpush1.msra.mxu0 0.0
    %552 = vmatprep.subr.mxu0 0.0
    %553 = vmatpush1.msra.mxu0 0.0
    %554 = vmatprep.subr.mxu0 0.0
    %555 = vmatpush1.msra.mxu0 0.0
    %556 = vmatprep.subr.mxu0 0.0
    %557 = vmatpush1.msra.mxu0 0.0
    %558 = vmatprep.subr.mxu0 0.0
    %559 = vmatpush1.msra.mxu0 0.0
    %560 = vmatprep.subr.mxu0 0.0
    %561 = vmatpush1.msra.mxu0 0.0
    %562 = vmatprep.subr.mxu0 0.0
    %563 = vmatpush1.msra.mxu0 0.0
    %564 = vmatprep.mubr.f32.mxu0 0.0
    %565 = vmatmul.mubr.f32.gmra.mrb[0].mxu0 %v498
    %v566 = vpop.f32.mrb[0].mxu0
    %v567 = vadd.f32 0.0, %v566
    %v568 = vpop.f32.mrb[0].mxu0
    %569 = vdwg.mxu0
    %v570 = vadd.f32 %v490, %v567
    %v571 = vmax.f32 %v570, 0.0
    %v572 = vld [vmem:[%s6] sm:$0xff]
    %v573 = vld [vmem:[%s6 + $0x8] sm:$0xff]
    %v574 = vld [vmem:[%s6 + $0x10] sm:$0xff]
    %v575 = vld [vmem:[%s6 + $0x18] sm:$0xff]
    %v576 = vld [vmem:[%s6 + $0x20] sm:$0xff]
    %v577 = vld [vmem:[%s6 + $0x28] sm:$0xff]
    %v578 = vld [vmem:[%s6 + $0x30] sm:$0xff]
    %v579 = vld [vmem:[%s6 + $0x38] sm:$0xff]
    %v580 = vld [vmem:[%s6 + $0x40] sm:$0xff]
    %v581 = vld [vmem:[%s6 + $0x48] sm:$0xff]
    %v582 = vld [vmem:[%s6 + $0x50] sm:$0xff]
    %v583 = vld [vmem:[%s6 + $0x58] sm:$0xff]
    %v584 = vld [vmem:[%s6 + $0x60] sm:$0xff]
    %v585 = vld [vmem:[%s6 + $0x68] sm:$0xff]
    %v586 = vld [vmem:[%s6 + $0x70] sm:$0xff]
    %v587 = vld [vmem:[%s6 + $0x78] sm:$0xff]
    %v588 = vlaneseq
    %v589 = vshrl.u32 %v588, 7
    %v590 = vsub.s32 4, %v589
    %v591 = vrot.slane %v44, %v590
    %592 = vmatprep.subr.mxu0 0.0
    %593 = vmatpush1.msra.mxu0 %v572
    %594 = vmatprep.subr.mxu0 0.0
    %595 = vmatpush1.msra.mxu0 %v573
    %596 = vmatprep.subr.mxu0 0.0
    %597 = vmatpush1.msra.mxu0 %v574
    %598 = vmatprep.subr.mxu0 0.0
    %599 = vmatpush1.msra.mxu0 %v575
    %600 = vmatprep.subr.mxu0 0.0
    %601 = vmatpush1.msra.mxu0 %v576
    %602 = vmatprep.subr.mxu0 0.0
    %603 = vmatpush1.msra.mxu0 %v577
    %604 = vmatprep.subr.mxu0 0.0
    %605 = vmatpush1.msra.mxu0 %v578
    %606 = vmatprep.subr.mxu0 0.0
    %607 = vmatpush1.msra.mxu0 %v579
    %608 = vmatprep.subr.mxu0 0.0
    %609 = vmatpush1.msra.mxu0 %v580
    %610 = vmatprep.subr.mxu0 0.0
    %611 = vmatpush1.msra.mxu0 %v581
    %612 = vmatprep.subr.mxu0 0.0
    %613 = vmatpush1.msra.mxu0 %v582
    %614 = vmatprep.subr.mxu0 0.0
    %615 = vmatpush1.msra.mxu0 %v583
    %616 = vmatprep.subr.mxu0 0.0
    %617 = vmatpush1.msra.mxu0 %v584
    %618 = vmatprep.subr.mxu0 0.0
    %619 = vmatpush1.msra.mxu0 %v585
    %620 = vmatprep.subr.mxu0 0.0
    %621 = vmatpush1.msra.mxu0 %v586
    %622 = vmatprep.subr.mxu0 0.0
    %623 = vmatpush1.msra.mxu0 %v587
    %624 = vmatprep.subr.mxu0 0.0
    %625 = vmatpush1.msra.mxu0 0.0
    %626 = vmatprep.subr.mxu0 0.0
    %627 = vmatpush1.msra.mxu0 0.0
    %628 = vmatprep.subr.mxu0 0.0
    %629 = vmatpush1.msra.mxu0 0.0
    %630 = vmatprep.subr.mxu0 0.0
    %631 = vmatpush1.msra.mxu0 0.0
    %632 = vmatprep.subr.mxu0 0.0
    %633 = vmatpush1.msra.mxu0 0.0
    %634 = vmatprep.subr.mxu0 0.0
    %635 = vmatpush1.msra.mxu0 0.0
    %636 = vmatprep.subr.mxu0 0.0
    %637 = vmatpush1.msra.mxu0 0.0
    %638 = vmatprep.subr.mxu0 0.0
    %639 = vmatpush1.msra.mxu0 0.0
    %640 = vmatprep.subr.mxu0 0.0
    %641 = vmatpush1.msra.mxu0 0.0
    %642 = vmatprep.subr.mxu0 0.0
    %643 = vmatpush1.msra.mxu0 0.0
    %644 = vmatprep.subr.mxu0 0.0
    %645 = vmatpush1.msra.mxu0 0.0
    %646 = vmatprep.subr.mxu0 0.0
    %647 = vmatpush1.msra.mxu0 0.0
    %648 = vmatprep.subr.mxu0 0.0
    %649 = vmatpush1.msra.mxu0 0.0
    %650 = vmatprep.subr.mxu0 0.0
    %651 = vmatpush1.msra.mxu0 0.0
    %652 = vmatprep.subr.mxu0 0.0
    %653 = vmatpush1.msra.mxu0 0.0
    %654 = vmatprep.subr.mxu0 0.0
    %655 = vmatpush1.msra.mxu0 0.0
    %656 = vmatprep.mubr.f32.mxu0 0.0
    %657 = vmatmul.mubr.f32.gmra.mrb[0].mxu0 %v571
    %v658 = vpop.f32.mrb[0].mxu0
    %v659 = vadd.f32 %v591, %v658
    %v660 = vpop.f32.mrb[0].mxu0
    %661 = vdwg.mxu0
    %v662 = vlaneseq
    %v663 = vand.u32 %v662, 127
    %vm664 = vcmp.lt.s32.totalorder %v663, 4
    %v665 = vsel %vm664, %v659, -inf
    %666 = vmax.xlane.f32.xlu0 %v665
    %v667 = vpop.xlane.xlu0 %666
    %v668 = vsub.f32 %v665, %v667
    %v669 = vmul.f32 %v668, 1.442695
    %v670 = vpow.pop %v669
    %671 = vadd.xlane.f32.xlu0 %v670
    %v672 = vpop.xlane.xlu0 %671
    %v673 = vrcp.pop %v672
    %v674 = vmul.f32 %v670, %v673
    %vm675 = vcmp.eq.s32.totalorder %v663, 4
    %v676 = vsel %vm675, %v659, %v674
    %677 = vst [vmem:[#allocation5] sm:$0xff] %v676
    // Predicated region
    $region38: #{tpu_custom_call.1} parent=1 // pred_check
      _
    $region39: #{tpu_custom_call.1} parent=1 // pred_check_branch
      %679 = sbr.rel (0) target = $region41
    $region40: #{tpu_custom_call.1} parent=1 // pred_region
      %s681 = ssub.s32 128, 128
      %682 = vsyncadd [#allocation4], %s681
      %s684 = sshll.u32 [#allocation5], 4
      %s685 = int_to_ptr.vmem [resolvable:$true] %s684
      %687 = dma.vmem_to_hbm [thread:$0]  %s685, 128, %s8, [#allocation4]
    $region41: #{tpu_custom_call.1} parent=1 // pred_fallthru
      _
    // Predicated region
    $region42: #{tpu_custom_call.1} parent=1 // pred_check
      _
    $region43: #{tpu_custom_call.1} parent=1 // pred_check_branch
      %689 = sbr.rel (0) target = $region45
    $region44: #{tpu_custom_call.1} parent=1 // pred_region
      %690 = dma.done [#allocation4], 128
    $region45: #{tpu_custom_call.1} parent=1 // pred_fallthru
      _
    %691 = vsyncpa [#allocation3], 1
    %692 = vsyncpa [#allocation4], 1

</llo_original>
